<compile_context>
chip_gen: v7x
topology: tpu7x:2x2x1
jax: 0.10.0
libtpu: 0.0.40
codegen_flags: <defaults>
</compile_context>

<pallas_src>
import math
import functools
import numpy as np
import jax
import jax.numpy as jnp
from jax.experimental import pallas as pl
from jax.experimental.pallas import tpu as pltpu


def _round_up(x, m):
    return ((x + m - 1) // m) * m


def _cdiv(a, b):
    return (a + b - 1) // b


# ------------------------------ kernel body ----------------------------------
def _linear_bias_kernel(x_ref, w_ref, b_ref, o_ref):
    # x_ref: (tm, K)   w_ref: (K, tn)   b_ref: (1, tn) f32   o_ref: (tm, tn)
    # Full-K blocks => single MXU matmul per output tile, f32 accumulation,
    # bias folded into the store (no scratch accumulator, no pl.when).
    acc = jnp.dot(x_ref[...], w_ref[...], preferred_element_type=jnp.float32)
    o_ref[...] = (acc + b_ref[...]).astype(o_ref.dtype)


# ------------------------------ forward wrapper -------------------------------
def circulant_linear_pallas(x, weight_t, bias, *,
                            tm=512, tn=512,
                            compute_dtype=jnp.bfloat16,
                            resident_weight_bytes=6 * 1024 * 1024,
                            vmem_limit_bytes=48 * 1024 * 1024,
                            core_parallel_m=False):
    """x: [..., K]; weight_t: (K, N) lane-dense RHS (ideally pre-cast to
    compute_dtype by materialize_weight_t); bias: (N,) or None.
    Returns [..., N] in x.dtype; matmul accumulates in f32 on the MXU."""
    K, N = weight_t.shape
    assert x.shape[-1] == K
    lead_shape = x.shape[:-1]
    out_dtype = x.dtype

    x2d = x.reshape(-1, K)
    M = x2d.shape[0]

    # Operand dtype for the MXU. The weight cast is a no-op when
    # materialize_weight_t already produced compute_dtype (the intended usage).
    if compute_dtype is not None:
        if x2d.dtype != compute_dtype:
            x2d = x2d.astype(compute_dtype)
        if weight_t.dtype != compute_dtype:
            weight_t = weight_t.astype(compute_dtype)

    itemsize = jnp.dtype(x2d.dtype).itemsize
    out_itemsize = jnp.dtype(out_dtype).itemsize
    # Sublane packing granularity of the operand dtype: f32 -> 8, bf16 -> 16,
    # int8/fp8 -> 32.
    sub = max(8, 32 // itemsize)

    if bias is None:
        bias2d = jnp.zeros((1, N), dtype=jnp.float32)
    else:
        bias2d = bias.astype(jnp.float32).reshape(1, N)

    # Tile sizes. Blocks never exceed the array extent (full-extent dims are
    # exempt from the (8,128) tiling constraint); interior tiles stay at
    # sublane/lane multiples so stores are unmasked.
    tm = _round_up(max(tm, sub), sub)
    tn = _round_up(max(tn, 128), 128)
    tm_eff = M if M <= tm else tm
    tn_eff = N if N <= tn else tn

    fast = K * N * itemsize <= resident_weight_bytes
    if fast:
        tn_eff = N   # whole weight panel resident; output tile spans full N

    # Bounded tile-shrink guard so the double-buffered footprint stays under
    # the scoped VMEM limit for arbitrary K.
    budget = int(0.75 * vmem_limit_bytes)

    def _vmem_need(tm_, tn_):
        x_buf = 2 * tm_ * K * itemsize
        w_buf = (2 * K * N * itemsize) if fast else (2 * K * tn_ * itemsize)
        o_buf = 2 * tm_ * tn_ * out_itemsize
        b_buf = 2 * tn_ * 4
        return x_buf + w_buf + o_buf + b_buf

    for _ in range(16):
        if _vmem_need(tm_eff, tn_eff) <= budget:
            break
        if tm_eff > sub and (fast or tm_eff >= tn_eff or tn_eff <= 128):
            tm_eff = max(sub, _round_up(tm_eff // 2, sub))
        elif (not fast) and tn_eff > 128:
            tn_eff = max(128, _round_up(tn_eff // 2, 128))
        else:
            break

    grid_m = _cdiv(M, tm_eff)
    grid_n = 1 if fast else _cdiv(N, tn_eff)

    # v7x: set core_parallel_m=True to shard the M axis across the 2 TCs.
    m_sem = pltpu.CORE_PARALLEL if core_parallel_m else "parallel"

    # Advisory cost: account for the weight/activation re-reads of the tiled
    # schedule (1x each on the resident-weight fast path).
    flops = 2 * M * N * K
    bytes_accessed = (grid_n * M * K * itemsize
                      + grid_m * K * N * itemsize
                      + N * 4
                      + M * N * out_itemsize)
    cost = pl.CostEstimate(flops=flops, transcendentals=0,
                           bytes_accessed=bytes_accessed)

    compiler_params = pltpu.CompilerParams(
        dimension_semantics=(m_sem,) if fast else (m_sem, "parallel"),
        vmem_limit_bytes=vmem_limit_bytes)

    if fast:
        # Resident weight: DMA'd once (constant block index), revisited across
        # the whole M loop; x streamed once, output written once.
        grid_spec = pltpu.PrefetchScalarGridSpec(
            num_scalar_prefetch=0,
            grid=(grid_m,),
            in_specs=[
                pl.BlockSpec((tm_eff, K), lambda i: (i, 0)),
                pl.BlockSpec((K, N), lambda i: (0, 0)),
                pl.BlockSpec((1, N), lambda i: (0, 0)),
            ],
            out_specs=pl.BlockSpec((tm_eff, N), lambda i: (i, 0)),
        )
    else:
        grid_spec = pltpu.PrefetchScalarGridSpec(
            num_scalar_prefetch=0,
            grid=(grid_m, grid_n),
            in_specs=[
                pl.BlockSpec((tm_eff, K), lambda i, j: (i, 0)),
                pl.BlockSpec((K, tn_eff), lambda i, j: (0, j)),
                pl.BlockSpec((1, tn_eff), lambda i, j: (0, j)),
            ],
            out_specs=pl.BlockSpec((tm_eff, tn_eff), lambda i, j: (i, j)),
        )

    out2d = pl.pallas_call(
        _linear_bias_kernel,
        out_shape=jax.ShapeDtypeStruct((M, N), out_dtype),
        grid_spec=grid_spec,
        compiler_params=compiler_params,
        cost_estimate=cost,
    )(x2d, weight_t, bias2d)

    return out2d.reshape(*lead_shape, N)


# ------------------------ parameter / index construction ----------------------
def build_circulant_params(in_features, out_features, num_cir=4, seed=0):
    """Deterministically build (weight_list, index_matrix, bias) matching the
    PyTorch module's __init__ / reset_parameters shapes."""
    min_features = min(in_features, out_features)
    assert min_features % num_cir == 0
    num_cir_in = num_cir * in_features // min_features
    num_cir_out = num_cir * out_features // min_features
    fea_block = min_features // num_cir

    # scipy.linalg.circulant(range(n))[i, j] == (i - j) % n
    i = np.arange(fea_block)[:, None]
    j = np.arange(fea_block)[None, :]
    circ = (i - j) % fea_block

    blocks = []
    for ib in range(num_cir_out):
        row = [circ + (ib * num_cir_in + jb) * fea_block
               for jb in range(num_cir_in)]
        blocks.append(np.concatenate(row, axis=1))
    index_matrix = np.concatenate(blocks, axis=0)  # (out_features, in_features)

    key = jax.random.PRNGKey(seed)
    kw, kb = jax.random.split(key)
    fan_in_w = num_cir_in * fea_block
    gain = math.sqrt(2.0 / (1.0 + 5.0))            # kaiming_uniform_ with a=sqrt(5)
    bound_w = gain * math.sqrt(3.0 / fan_in_w)
    weight_list = jax.random.uniform(
        kw, (num_cir_out * num_cir_in * fea_block,),
        minval=-bound_w, maxval=bound_w, dtype=jnp.float32)

    bound_b = 1.0 / math.sqrt(in_features)
    bias = jax.random.uniform(
        kb, (out_features,), minval=-bound_b, maxval=bound_b, dtype=jnp.float32)

    return weight_list, jnp.asarray(index_matrix, dtype=jnp.int32), bias


def materialize_weight_t(weight_list, index_matrix, compute_dtype=jnp.bfloat16):
    """Circulant gather + one-time transpose to the lane-dense (K, N) RHS, cast
    to the MXU compute dtype. Call once per parameter update (or once at load
    time for inference) and reuse across forward calls — this is pure HBM glue
    and must not run in the per-forward path."""
    weight = weight_list[index_matrix]          # (out_features, in_features)
    weight_t = weight.T                         # (K, N) = (in_features, out_features)
    if compute_dtype is not None:
        weight_t = weight_t.astype(compute_dtype)
    return weight_t


@functools.partial(jax.jit, static_argnames=(
    "tm", "tn", "compute_dtype", "resident_weight_bytes",
    "vmem_limit_bytes", "core_parallel_m"))
def circulant_linear_forward(x, weight_t, bias, *, tm=512, tn=512,
                             compute_dtype=jnp.bfloat16,
                             resident_weight_bytes=6 * 1024 * 1024,
                             vmem_limit_bytes=48 * 1024 * 1024,
                             core_parallel_m=False):
    return circulant_linear_pallas(
        x, weight_t, bias, tm=tm, tn=tn, compute_dtype=compute_dtype,
        resident_weight_bytes=resident_weight_bytes,
        vmem_limit_bytes=vmem_limit_bytes, core_parallel_m=core_parallel_m)


# ----------------------------------- main -------------------------------------
if __name__ == "__main__":
    # Small shapes consistent with the module: in=32, out=32, num_cir=4 -> fea_block=8
    in_features, out_features, num_cir = 32, 32, 4
    batch, seq = 2, 8

    weight_list, index_matrix, bias = build_circulant_params(
        in_features, out_features, num_cir, seed=0)

    kx = jax.random.PRNGKey(0)
    x = jax.random.normal(kx, (batch, seq, in_features), dtype=jnp.float32)

    # Hoisted circulant gather + transpose + bf16 cast (amortized across calls).
    weight_t = materialize_weight_t(weight_list, index_matrix,
                                    compute_dtype=jnp.bfloat16)

    # Default path: bf16 operands, resident-weight schedule.
    out = circulant_linear_forward(x, weight_t, bias)
    out = jax.block_until_ready(out)

    # Reference with the same bf16 operand rounding + f32 accumulation.
    w_dense = weight_list[index_matrix]                     # (out, in)
    x_r = x.astype(jnp.bfloat16).astype(jnp.float32)
    w_r = w_dense.astype(jnp.bfloat16).astype(jnp.float32)
    ref_bf16 = jnp.einsum("bsi,oi->bso", x_r, w_r) + bias
    np.testing.assert_allclose(np.asarray(out), np.asarray(ref_bf16),
                               rtol=2e-3, atol=2e-3)

    # Also exercise the exact-f32 path and the (M, N)-tiled fallback schedule.
    weight_t_f32 = materialize_weight_t(weight_list, index_matrix,
                                        compute_dtype=None)
    out_tiled = circulant_linear_pallas(x, weight_t_f32, bias,
                                        compute_dtype=None,
                                        resident_weight_bytes=0)
    out_tiled = jax.block_until_ready(out_tiled)
    ref_f32 = jnp.einsum("bsi,oi->bso", x, w_dense) + bias
    np.testing.assert_allclose(np.asarray(out_tiled), np.asarray(ref_f32),
                               rtol=1e-5, atol=1e-5)

    print("KERNEL_OK")
</pallas_src>

<mosaic_0001>
module attributes {stable_mosaic.version = 11 : i64} {
  func.func @_linear_bias_kernel(%arg0: i32, %arg1: memref<16x32xbf16, #tpu.memory_space<vmem>>, %arg2: memref<32x32xbf16, #tpu.memory_space<vmem>>, %arg3: memref<1x32xf32, #tpu.memory_space<vmem>>, %arg4: memref<16x32xf32, #tpu.memory_space<vmem>>) attributes {dimension_semantics = [#tpu.dimension_semantics<parallel>], iteration_bounds = array<i64: 1>, scalar_prefetch = 0 : i64, scratch_operands = 0 : i64, tpu.core_type = #tpu.core_type<tc>, window_params = [{transform_indices = @transform_0, window_bounds = array<i64: 16, 32>}, {pipeline_mode = #tpu.pipeline_mode<synchronous>, transform_indices = @transform_1, window_bounds = array<i64: 32, 32>}, {pipeline_mode = #tpu.pipeline_mode<synchronous>, transform_indices = @transform_2, window_bounds = array<i64: 1, 32>}, {transform_indices = @transform_3, window_bounds = array<i64: 16, 32>}]} {
    %c0 = arith.constant 0 : index
    %c0_0 = arith.constant 0 : index
    %0 = vector.load %arg1[%c0, %c0_0] : memref<16x32xbf16, #tpu.memory_space<vmem>>, vector<16x32xbf16>
    %c0_1 = arith.constant 0 : index
    %c0_2 = arith.constant 0 : index
    %1 = vector.load %arg2[%c0_1, %c0_2] : memref<32x32xbf16, #tpu.memory_space<vmem>>, vector<32x32xbf16>
    %cst = arith.constant dense<0.000000e+00> : vector<16x32xf32>
    %2 = tpu.matmul %0, %1, %cst {dimension_numbers = #tpu.dot_dimension_numbers<[1], [0], [0], [1], [0, 0, 1, 1], [], []>} : vector<16x32xbf16>, vector<32x32xbf16>, vector<16x32xf32> -> vector<16x32xf32>
    %c0_3 = arith.constant 0 : index
    %c0_4 = arith.constant 0 : index
    %3 = vector.load %arg3[%c0_3, %c0_4] : memref<1x32xf32, #tpu.memory_space<vmem>>, vector<1x32xf32>
    %4 = vector.broadcast %3 : vector<1x32xf32> to vector<16x32xf32>
    %5 = arith.addf %2, %4 : vector<16x32xf32>
    %c0_5 = arith.constant 0 : index
    %c0_6 = arith.constant 0 : index
    %6 = vector.load %arg4[%c0_5, %c0_6] : memref<16x32xf32, #tpu.memory_space<vmem>>, vector<16x32xf32>
    tpu.vector_store %arg4[%c0_5, %c0_6], %5 {strides = array<i32>} : memref<16x32xf32, #tpu.memory_space<vmem>>, vector<16x32xf32>,
    return
  }
  func.func @transform_0(%arg0: i32) -> (i32, i32) {
    %c0_i32 = arith.constant 0 : i32
    %c0_i32_0 = arith.constant 0 : i32
    return %arg0, %c0_i32 : i32, i32
  }
  func.func @transform_1(%arg0: i32) -> (i32, i32) {
    %c0_i32 = arith.constant 0 : i32
    %c0_i32_0 = arith.constant 0 : i32
    %c0_i32_1 = arith.constant 0 : i32
    return %c0_i32, %c0_i32_0 : i32, i32
  }
  func.func @transform_2(%arg0: i32) -> (i32, i32) {
    %c0_i32 = arith.constant 0 : i32
    %c0_i32_0 = arith.constant 0 : i32
    %c0_i32_1 = arith.constant 0 : i32
    return %c0_i32, %c0_i32_0 : i32, i32
  }
  func.func @transform_3(%arg0: i32) -> (i32, i32) {
    %c0_i32 = arith.constant 0 : i32
    %c0_i32_0 = arith.constant 0 : i32
    return %arg0, %c0_i32 : i32, i32
  }
}

</mosaic_0001>

<llo_original>
// kernel: circulant_linear_forward.1
$region0: #{circulant_linear_forward.1}
  #allocation0 [shape = 'u32[]', space=smem, size = 0x4, offset = 0x4, fixed_abs, tag = 'smem constant byte address 0x4 - core index']
  #allocation1 [shape = 'u32[144,128]{1,0:T(1,128)}', space=vmem, size = 0x12000, scoped, tag = 'internal scratch']
  %s0 = inlined_call_operand.vmem [shape: bf16[16,32], index: 0, kind: input, shape index: {}]
  %s1 = inlined_call_operand.vmem [shape: bf16[32,32], index: 1, kind: input, shape index: {}]
  %s2 = inlined_call_operand.vmem [shape: f32[1,32], index: 2, kind: input, shape index: {}]
  %s3 = inlined_call_operand.hbm [shape: f32[16,32], index: 3, kind: output, shape index: {}]
  %s4 = sld [smem:[#allocation0]]
  $region22: #{circulant_linear_forward.1} parent=0
    _
  %s6 = ssub.s32 1, %s4
  %s7 = scalar_select 0, %s6, %s4
  $region1: #{circulant_linear_forward.1} parent=0
    #allocation2 [shape = 'u8[8192]{0}', space=vmem, size = 0x2000, scoped, tag = 'output window, operand 0, single buffered']
    #allocation3 [shape = 's32[1]{0}', space=sflag, size = 0x4, scoped, tag = 'scoped memory for circulant_linear_forward.1']
    %8 = vsyncpa [#allocation3], 0
    // Predicated region
    $region2: #{circulant_linear_forward.1} parent=1 // pred_check
      _
    $region3: #{circulant_linear_forward.1} parent=1 // pred_check_branch
      %10 = sbr.rel (0) target = $region5
    $region4: #{circulant_linear_forward.1} parent=1 // pred_region
      _
    $region5: #{circulant_linear_forward.1} parent=1 // pred_fallthru
      _
    // Predicated region
    $region6: #{circulant_linear_forward.1} parent=1 // pred_check
      _
    $region7: #{circulant_linear_forward.1} parent=1 // pred_check_branch
      %12 = sbr.rel (0) target = $region9
    $region8: #{circulant_linear_forward.1} parent=1 // pred_region
      _
    $region9: #{circulant_linear_forward.1} parent=1 // pred_fallthru
      _
    // Predicated region
    $region10: #{circulant_linear_forward.1} parent=1 // pred_check
      _
    $region11: #{circulant_linear_forward.1} parent=1 // pred_check_branch
      %14 = sbr.rel (0) target = $region13
    $region12: #{circulant_linear_forward.1} parent=1 // pred_region
      _
    $region13: #{circulant_linear_forward.1} parent=1 // pred_fallthru
      _
    %v16 = vld [vmem:[%s0] sm:$0xf]
    %v17 = vld [vmem:[%s0 + $0x4] sm:$0xf]
    %v18 = vld [vmem:[%s1] sm:$0xf]
    %v19 = vld [vmem:[%s1 + $0x4] sm:$0xf]
    %v20 = vld [vmem:[%s1 + $0x8] sm:$0xf]
    %v21 = vld [vmem:[%s1 + $0xc] sm:$0xf]
    %v22 = vld [vmem:[%s2] sm:$0x1]
    %v24 = vlaneseq
    %v25 = vshrl.u32 %v24, 7
    %v26 = vsub.s32 0, %v25
    %v27 = vrot.slane %v22, %v26
    %v31 = vunpack.c.l.b16 %v16
    %v32 = vunpack.c.l.b16 %v17
    %v33 = vpack.c.b16 %v32, %v31
    %v38 = vunpack.c.l.b16 %v18
    %v39 = vunpack.c.l.b16 %v19
    %v40 = vunpack.c.l.b16 %v20
    %v41 = vunpack.c.l.b16 %v21
    %v42 = vpack.c.b16 %v39, %v38
    %v43 = vpack.c.b16 %v41, %v40
    %vm46 = vcmask 261120
    %v48 = vsel %vm46, %v33, 0
    %50 = vmatprep.subr.bf16.mxu0 0
    %51 = vmatpush1.bf16.msra.mxu0 %v42
    %52 = vmatprep.subr.bf16.mxu0 0
    %53 = vmatpush1.bf16.msra.mxu0 %v43
    %54 = vmatprep.subr.bf16.mxu0 0
    %55 = vmatpush1.bf16.msra.mxu0 0
    %56 = vmatprep.subr.bf16.mxu0 0
    %57 = vmatpush1.bf16.msra.mxu0 0
    %58 = vmatprep.subr.bf16.mxu0 0
    %59 = vmatpush1.bf16.msra.mxu0 0
    %60 = vmatprep.subr.bf16.mxu0 0
    %61 = vmatpush1.bf16.msra.mxu0 0
    %62 = vmatprep.subr.bf16.mxu0 0
    %63 = vmatpush1.bf16.msra.mxu0 0
    %64 = vmatprep.subr.bf16.mxu0 0
    %65 = vmatpush1.bf16.msra.mxu0 0
    %66 = vmatprep.subr.bf16.mxu0 0
    %67 = vmatpush1.bf16.msra.mxu0 0
    %68 = vmatprep.subr.bf16.mxu0 0
    %69 = vmatpush1.bf16.msra.mxu0 0
    %70 = vmatprep.subr.bf16.mxu0 0
    %71 = vmatpush1.bf16.msra.mxu0 0
    %72 = vmatprep.subr.bf16.mxu0 0
    %73 = vmatpush1.bf16.msra.mxu0 0
    %74 = vmatprep.subr.bf16.mxu0 0
    %75 = vmatpush1.bf16.msra.mxu0 0
    %76 = vmatprep.subr.bf16.mxu0 0
    %77 = vmatpush1.bf16.msra.mxu0 0
    %78 = vmatprep.subr.bf16.mxu0 0
    %79 = vmatpush1.bf16.msra.mxu0 0
    %80 = vmatprep.subr.bf16.mxu0 0
    %81 = vmatpush1.bf16.msra.mxu0 0
    %82 = vmatprep.mubr.bf16.mxu0 0
    %83 = vmatmul.mubr.bf16.gmra.mrb[0].mxu0 %v48
    %v84 = vpop.f32.mrb[0].mxu0
    %v85 = vadd.f32 %v27, %v84
    %v86 = vpop.f32.mrb[0].mxu0
    %v87 = vpop.f32.mrb[0].mxu0
    %v88 = vadd.f32 %v27, %v87
    %v89 = vpop.f32.mrb[0].mxu0
    %90 = vdwg.mxu0
    %91 = vst.msk [vmem:[#allocation2] sm:$0xff] %vm46, %v85
    %92 = vst.msk [vmem:[#allocation2 + $0x8] sm:$0xff] %vm46, %v88
    // Predicated region
    $region14: #{circulant_linear_forward.1} parent=1 // pred_check
      _
    $region15: #{circulant_linear_forward.1} parent=1 // pred_check_branch
      %94 = sbr.rel (0) target = $region17
    $region16: #{circulant_linear_forward.1} parent=1 // pred_region
      %s96 = ssub.s32 256, 256
      %97 = vsyncadd [#allocation3], %s96
      %s98 = sshll.u32 [#allocation2], 4
      %s99 = int_to_ptr.vmem [resolvable:$true] %s98
      %104 = dma.vmem_to_hbm [thread:$0]  %s99, 256, %s3, [#allocation3], 128, 128, 8
    $region17: #{circulant_linear_forward.1} parent=1 // pred_fallthru
      _
    // Predicated region
    $region18: #{circulant_linear_forward.1} parent=1 // pred_check
      _
    $region19: #{circulant_linear_forward.1} parent=1 // pred_check_branch
      %106 = sbr.rel (0) target = $region21
    $region20: #{circulant_linear_forward.1} parent=1 // pred_region
      %107 = dma.done [#allocation3], 256
    $region21: #{circulant_linear_forward.1} parent=1 // pred_fallthru
      _
    %108 = vsyncpa [#allocation3], 1

</llo_original>
